<compile_context>
chip_gen: v7x
topology: tpu7x:2x2x1
jax: 0.10.0
libtpu: 0.0.40
codegen_flags: <defaults>
</compile_context>

<pallas_src>
import functools

import jax
import jax.numpy as jnp
from jax import lax
from jax.experimental import pallas as pl
from jax.experimental.pallas import tpu as pltpu

NEG_SLOPE = 0.2
NEG_MASK = -1e30   # masked-score sentinel: exp(NEG_MASK - finite_max) == 0.0


# --------------------------- projection kernel -----------------------------
def gat_project_kernel(feat_ref, w_ref, alr_ref, z_ref, s_ref):
    """Per-layer feature projection, run ONCE (grid=(1,)).

    feat_ref: (N, Fin)    node features
    w_ref   : (Fin, Fout) GATConv weight
    alr_ref : (Fout, 2)   [a_l | a_r] attention vectors
    z_ref   : (N, Fout)   projected features (bf16, for the aggregation MXU)
    s_ref   : (N, 2)      per-node scores [z@a_l | z@a_r] (f32)
    """
    z = jnp.dot(feat_ref[...], w_ref[...], preferred_element_type=jnp.float32)
    s_ref[...] = jnp.dot(z, alr_ref[...], preferred_element_type=jnp.float32)
    z_ref[...] = z.astype(z_ref.dtype)


# --------------------------- attention kernel ------------------------------
def gat_attend_kernel(z_ref, el_ref, er_ref, mask_ref, b_ref, out_ref, *,
                      apply_relu):
    """Dense GAT attention + aggregation for one dst-row tile.

    z_ref   : (N, Fout)  bf16  source projections (resident across the grid)
    el_ref  : (1, N)     f32   per-source score row (resident)
    er_ref  : (TM, 1)    f32   per-dst score column of this tile
    mask_ref: (TM, N)    int8  adjacency {0,1} for this tile
    b_ref   : (1, Fout)  f32   bias (resident)
    out_ref : (TM, Fout) f32
    """
    # e[d, s] = er[d] + el[s]  -- pure VPU broadcast add (no MXU involved).
    e = er_ref[...] + el_ref[...]
    e = jnp.maximum(e, NEG_SLOPE * e)                    # LeakyReLU(0.2)
    m = mask_ref[...].astype(jnp.float32)                # int8 {0,1} -> f32
    e = jnp.where(m > 0.0, e, NEG_MASK)                  # mask non-edges

    row_max = jnp.max(e, axis=-1, keepdims=True)         # finite (self-loops)
    p = jnp.exp(e - row_max)                             # masked entries -> 0
    denom = jnp.sum(p, axis=-1, keepdims=True)           # >= 1

    # Deferred softmax normalization; bf16 inputs / f32 accumulation on MXU.
    agg = jnp.dot(p.astype(jnp.bfloat16), z_ref[...],
                  preferred_element_type=jnp.float32)
    out = agg * pl.reciprocal(denom, approx=True) + b_ref[...]
    if apply_relu:
        out = jnp.maximum(out, 0.0)
    out_ref[...] = out.astype(out_ref.dtype)


# ------------------------------- wrappers -----------------------------------
def _default_tile_m():
    """Dst-row tile: v7x (64 MiB VMEM/TC) -> 128, v5e/v6e (128 MiB) -> 256."""
    try:
        kind = jax.devices()[0].device_kind.lower()
        if "v7" in kind:
            return 128
    except Exception:
        pass
    return 256


def _gat_layer(feat, mask_i8, w, a_l, a_r, b, *, apply_relu, tm):
    n, fin = feat.shape
    fout = w.shape[1]

    # ---- projection: hoisted out of the dst-tile grid, run once per layer ----
    a_lr = jnp.concatenate([a_l, a_r], axis=1)                       # (Fout, 2)
    z_bf16, scores = pl.pallas_call(
        gat_project_kernel,
        out_shape=(jax.ShapeDtypeStruct((n, fout), jnp.bfloat16),
                   jax.ShapeDtypeStruct((n, 2), jnp.float32)),
        grid=(1,),
        in_specs=[pl.BlockSpec((n, fin), lambda i: (0, 0)),
                  pl.BlockSpec((fin, fout), lambda i: (0, 0)),
                  pl.BlockSpec((fout, 2), lambda i: (0, 0))],
        out_specs=(pl.BlockSpec((n, fout), lambda i: (0, 0)),
                   pl.BlockSpec((n, 2), lambda i: (0, 0))),
    )(feat, w, a_lr)
    # TODO(synk): for very large N the projection itself should be row-tiled.
    el_row = scores[:, 0].reshape(1, n)                              # (1, N)
    er_col = scores[:, 1:2]                                          # (N, 1)

    # ---- attention + aggregation, tiled over dst rows ----
    tm = min(tm, n)
    assert n % tm == 0, "pad N to a multiple of the dst tile"
    kernel = functools.partial(gat_attend_kernel, apply_relu=apply_relu)
    cost = pl.CostEstimate(flops=2 * n * n * fout + 6 * n * n,
                           transcendentals=n * n,
                           bytes_accessed=n * n + 6 * n * fout + 8 * n)

    def call(buffered):
        def resident(shape):
            # Constant-index_map blocks: single-buffer to reclaim VMEM.
            if buffered:
                return pl.BlockSpec(shape, lambda i: (0, 0),
                                    pipeline_mode=pl.Buffered(1))
            return pl.BlockSpec(shape, lambda i: (0, 0))

        return pl.pallas_call(
            kernel,
            out_shape=jax.ShapeDtypeStruct((n, fout), jnp.float32),
            grid_spec=pltpu.PrefetchScalarGridSpec(
                num_scalar_prefetch=0,
                grid=(n // tm,),
                in_specs=[
                    resident((n, fout)),                       # z (resident)
                    resident((1, n)),                          # el row (resident)
                    pl.BlockSpec((tm, 1), lambda i: (i, 0)),   # er tile
                    pl.BlockSpec((tm, n), lambda i: (i, 0)),   # int8 mask tile
                    resident((1, fout)),                       # bias (resident)
                ],
                out_specs=pl.BlockSpec((tm, fout), lambda i: (i, 0)),
            ),
            compiler_params=pltpu.CompilerParams(
                dimension_semantics=("parallel",)),            # megacore on v7x
            cost_estimate=cost,
        )(z_bf16, el_row, er_col, mask_i8, b)

    try:
        return call(buffered=True)
    except Exception:
        # Compatibility fallback if pipeline_mode=pl.Buffered(1) is rejected.
        return call(buffered=False)


def dense_gat_forward(feat, adj, params, *, tm=None):
    """Forward pass of DenseGAT (inference semantics).

    NOTE: every row of `adj` must have at least one nonzero entry (e.g. add
    self-loops); an all-masked dst row would silently produce the uniform mean
    of z instead of the reference's NaN.
    """
    if tm is None:
        tm = _default_tile_m()
    mask_i8 = (adj > 0).astype(jnp.int8)    # int8 edge mask: 4x less HBM than f32

    # conv1 + fused ReLU
    h = _gat_layer(feat, mask_i8, params["w1"], params["al1"], params["ar1"],
                   params["b1"], apply_relu=True, tm=tm)
    # F.dropout: identity (inference semantics).
    # TODO(synk): training-mode dropout would need pltpu.prng_seed/prng_random_bits.

    # conv2 -> logits == rst[:, 0, 0, :] in the reference (num_heads = 1)
    logits = _gat_layer(h, mask_i8, params["w2"], params["al2"], params["ar2"],
                        params["b2"], apply_relu=False, tm=tm)

    # F.log_softmax(rst, dim=1).squeeze(): dim=1 is the singleton head axis, so
    # the module's return value is identically zero (only valid for 1 head).
    out = jnp.zeros_like(logits)
    # TODO(synk): for tiny graphs both layers fit in VMEM; a single fused
    # grid=1 pallas_call would remove one launch + the HBM round trip of h.
    return out, logits


# --------------------------- pure-JAX reference ---------------------------
def _gat_layer_ref(h, adj, w, a_l, a_r, b):
    z = h @ w
    el = z @ a_l                                   # (N, 1)
    er = z @ a_r                                   # (N, 1)
    e = er + el.T                                  # e[d, s] = er[d] + el[s]
    e = jnp.where(e > 0, e, NEG_SLOPE * e)
    e = jnp.where(adj > 0, e, -jnp.inf)
    alpha = jax.nn.softmax(e, axis=-1)
    return alpha @ z + b


def dense_gat_ref(feat, adj, p):
    h = jax.nn.relu(_gat_layer_ref(feat, adj, p["w1"], p["al1"], p["ar1"], p["b1"]))
    logits = _gat_layer_ref(h, adj, p["w2"], p["al2"], p["ar2"], p["b2"])
    rst = logits[:, None, None, :]                 # (N, heads=1, 1, out) as in DGL
    out = jnp.squeeze(jax.nn.log_softmax(rst, axis=1))
    return out, logits
# ---------------------------------------------------------------------------


if __name__ == "__main__":
    N, in_size, hid_size, out_size = 64, 16, 32, 8

    key = jax.random.PRNGKey(0)
    ks = jax.random.split(key, 12)

    feat = jax.random.normal(ks[0], (N, in_size), jnp.float32)
    adj = jax.random.bernoulli(ks[1], 0.25, (N, N)).astype(jnp.float32)
    adj = jnp.maximum(adj, jnp.eye(N, dtype=jnp.float32))   # self-loops: in-degree >= 1

    params = dict(
        # conv1: GATConv(in_size, hid_size, 1)
        w1=0.2 * jax.random.normal(ks[2], (in_size, hid_size), jnp.float32),
        al1=0.2 * jax.random.normal(ks[3], (hid_size, 1), jnp.float32),
        ar1=0.2 * jax.random.normal(ks[4], (hid_size, 1), jnp.float32),
        b1=0.1 * jax.random.normal(ks[5], (1, hid_size), jnp.float32),
        # conv2: GATConv(hid_size, out_size, 1)
        w2=0.2 * jax.random.normal(ks[6], (hid_size, out_size), jnp.float32),
        al2=0.2 * jax.random.normal(ks[7], (out_size, 1), jnp.float32),
        ar2=0.2 * jax.random.normal(ks[8], (out_size, 1), jnp.float32),
        b2=0.1 * jax.random.normal(ks[9], (1, out_size), jnp.float32),
    )

    out, logits = dense_gat_forward(feat, adj, params)
    jax.block_until_ready((out, logits))

    out_ref, logits_ref = dense_gat_ref(feat, adj, params)

    assert out.shape == (N, out_size)
    # bf16 aggregation + approx reciprocal (EUP) add ~1e-3 relative error per
    # layer; 5e-2 absolute on the conv2 logits leaves comfortable margin.
    assert jnp.max(jnp.abs(logits - logits_ref)) < 5e-2, "conv2 logits mismatch"
    assert jnp.max(jnp.abs(out - out_ref)) < 1e-6, "final output mismatch"

    print("KERNEL_OK")
</pallas_src>

<mosaic_0001>
module attributes {stable_mosaic.version = 11 : i64} {
  func.func @gat_project_kernel(%arg0: i32, %arg1: memref<64x16xf32, #tpu.memory_space<vmem>>, %arg2: memref<16x32xf32, #tpu.memory_space<vmem>>, %arg3: memref<32x2xf32, #tpu.memory_space<vmem>>, %arg4: memref<64x32xbf16, #tpu.memory_space<vmem>>, %arg5: memref<64x2xf32, #tpu.memory_space<vmem>>) attributes {dimension_semantics = [#tpu.dimension_semantics<arbitrary>], iteration_bounds = array<i64: 1>, scalar_prefetch = 0 : i64, scratch_operands = 0 : i64, tpu.core_type = #tpu.core_type<tc>, window_params = [{pipeline_mode = #tpu.pipeline_mode<synchronous>, transform_indices = @transform_0, window_bounds = array<i64: 64, 16>}, {pipeline_mode = #tpu.pipeline_mode<synchronous>, transform_indices = @transform_1, window_bounds = array<i64: 16, 32>}, {pipeline_mode = #tpu.pipeline_mode<synchronous>, transform_indices = @transform_2, window_bounds = array<i64: 32, 2>}, {pipeline_mode = #tpu.pipeline_mode<synchronous>, transform_indices = @transform_3, window_bounds = array<i64: 64, 32>}, {pipeline_mode = #tpu.pipeline_mode<synchronous>, transform_indices = @transform_4, window_bounds = array<i64: 64, 2>}]} {
    %c0 = arith.constant 0 : index
    %c0_0 = arith.constant 0 : index
    %0 = vector.load %arg1[%c0, %c0_0] : memref<64x16xf32, #tpu.memory_space<vmem>>, vector<64x16xf32>
    %c0_1 = arith.constant 0 : index
    %c0_2 = arith.constant 0 : index
    %1 = vector.load %arg2[%c0_1, %c0_2] : memref<16x32xf32, #tpu.memory_space<vmem>>, vector<16x32xf32>
    %cst = arith.constant dense<0.000000e+00> : vector<64x32xf32>
    %2 = tpu.matmul %0, %1, %cst {dimension_numbers = #tpu.dot_dimension_numbers<[1], [0], [0], [1], [0, 0, 1, 1], [], []>} : vector<64x16xf32>, vector<16x32xf32>, vector<64x32xf32> -> vector<64x32xf32>
    %c0_3 = arith.constant 0 : index
    %c0_4 = arith.constant 0 : index
    %3 = vector.load %arg3[%c0_3, %c0_4] : memref<32x2xf32, #tpu.memory_space<vmem>>, vector<32x2xf32>
    %cst_5 = arith.constant dense<0.000000e+00> : vector<64x2xf32>
    %4 = tpu.matmul %2, %3, %cst_5 {dimension_numbers = #tpu.dot_dimension_numbers<[1], [0], [0], [1], [0, 0, 1, 1], [], []>} : vector<64x32xf32>, vector<32x2xf32>, vector<64x2xf32> -> vector<64x2xf32>
    %c0_6 = arith.constant 0 : index
    %c0_7 = arith.constant 0 : index
    %5 = vector.load %arg5[%c0_6, %c0_7] : memref<64x2xf32, #tpu.memory_space<vmem>>, vector<64x2xf32>
    tpu.vector_store %arg5[%c0_6, %c0_7], %4 {strides = array<i32>} : memref<64x2xf32, #tpu.memory_space<vmem>>, vector<64x2xf32>,
    %6 = arith.truncf %2 : vector<64x32xf32> to vector<64x32xbf16>
    %c0_8 = arith.constant 0 : index
    %c0_9 = arith.constant 0 : index
    %7 = vector.load %arg4[%c0_8, %c0_9] : memref<64x32xbf16, #tpu.memory_space<vmem>>, vector<64x32xbf16>
    tpu.vector_store %arg4[%c0_8, %c0_9], %6 {strides = array<i32>} : memref<64x32xbf16, #tpu.memory_space<vmem>>, vector<64x32xbf16>,
    return
  }
  func.func @transform_0(%arg0: i32) -> (i32, i32) {
    %c0_i32 = arith.constant 0 : i32
    %c0_i32_0 = arith.constant 0 : i32
    %c0_i32_1 = arith.constant 0 : i32
    return %c0_i32, %c0_i32_0 : i32, i32
  }
  func.func @transform_1(%arg0: i32) -> (i32, i32) {
    %c0_i32 = arith.constant 0 : i32
    %c0_i32_0 = arith.constant 0 : i32
    %c0_i32_1 = arith.constant 0 : i32
    return %c0_i32, %c0_i32_0 : i32, i32
  }
  func.func @transform_2(%arg0: i32) -> (i32, i32) {
    %c0_i32 = arith.constant 0 : i32
    %c0_i32_0 = arith.constant 0 : i32
    %c0_i32_1 = arith.constant 0 : i32
    return %c0_i32, %c0_i32_0 : i32, i32
  }
  func.func @transform_3(%arg0: i32) -> (i32, i32) {
    %c0_i32 = arith.constant 0 : i32
    %c0_i32_0 = arith.constant 0 : i32
    %c0_i32_1 = arith.constant 0 : i32
    return %c0_i32, %c0_i32_0 : i32, i32
  }
  func.func @transform_4(%arg0: i32) -> (i32, i32) {
    %c0_i32 = arith.constant 0 : i32
    %c0_i32_0 = arith.constant 0 : i32
    %c0_i32_1 = arith.constant 0 : i32
    return %c0_i32, %c0_i32_0 : i32, i32
  }
}

</mosaic_0001>

<llo_original>
// kernel: tpu_custom_call.1
$region0: #{tpu_custom_call.1}
  #allocation0 [shape = 'u32[]', space=smem, size = 0x4, offset = 0x4, fixed_abs, tag = 'smem constant byte address 0x4 - core index']
  #allocation1 [shape = 'u32[144,128]{1,0:T(1,128)}', space=vmem, size = 0x12000, scoped, tag = 'internal scratch']
  %s0 = inlined_call_operand.vmem [shape: f32[64,16], index: 0, kind: input, shape index: {}]
  %s1 = inlined_call_operand.vmem [shape: f32[16,32], index: 1, kind: input, shape index: {}]
  %s2 = inlined_call_operand.vmem [shape: f32[32,2], index: 2, kind: input, shape index: {}]
  %s3 = inlined_call_operand.vmem [shape: bf16[64,32], index: 3, kind: output, shape index: {0}]
  %s4 = inlined_call_operand.vmem [shape: f32[64,2], index: 4, kind: output, shape index: {1}]
  %5 = xla_tuple %s3, %s4
  %s6 = sld [smem:[#allocation0]]
  $region30: #{tpu_custom_call.1} parent=0
    _
  %s8 = ssub.s32 1, %s6
  %s9 = scalar_select 0, %s8, %s6
  // Predicated region
  $region2: #{tpu_custom_call.1} parent=0 // pred_check
    _
  $region3: #{tpu_custom_call.1} parent=0 // pred_check_branch
    %11 = sbr.rel (0) target = $region5
  $region4: #{tpu_custom_call.1} parent=0 // pred_region
    _
  $region5: #{tpu_custom_call.1} parent=0 // pred_fallthru
    _
  // Predicated region
  $region6: #{tpu_custom_call.1} parent=0 // pred_check
    _
  $region7: #{tpu_custom_call.1} parent=0 // pred_check_branch
    %13 = sbr.rel (0) target = $region9
  $region8: #{tpu_custom_call.1} parent=0 // pred_region
    _
  $region9: #{tpu_custom_call.1} parent=0 // pred_fallthru
    _
  // Predicated region
  $region10: #{tpu_custom_call.1} parent=0 // pred_check
    _
  $region11: #{tpu_custom_call.1} parent=0 // pred_check_branch
    %15 = sbr.rel (0) target = $region13
  $region12: #{tpu_custom_call.1} parent=0 // pred_region
    _
  $region13: #{tpu_custom_call.1} parent=0 // pred_fallthru
    _
  %v16 = vld [vmem:[%s0] sm:$0xff]
  %v17 = vld [vmem:[%s0 + $0x8] sm:$0xff]
  %v18 = vld [vmem:[%s0 + $0x10] sm:$0xff]
  %v19 = vld [vmem:[%s0 + $0x18] sm:$0xff]
  %v20 = vld [vmem:[%s0 + $0x20] sm:$0xff]
  %v21 = vld [vmem:[%s0 + $0x28] sm:$0xff]
  %v22 = vld [vmem:[%s0 + $0x30] sm:$0xff]
  %v23 = vld [vmem:[%s0 + $0x38] sm:$0xff]
  %v24 = vld [vmem:[%s1] sm:$0xff]
  %v25 = vld [vmem:[%s1 + $0x8] sm:$0xff]
  %vm26 = vcmask 130048
  %v28 = vsel %vm26, %v16, 0
  %v31 = vsel %vm26, %v17, 0
  %v34 = vsel %vm26, %v18, 0
  %v37 = vsel %vm26, %v19, 0
  %v40 = vsel %vm26, %v20, 0
  %v43 = vsel %vm26, %v21, 0
  %v46 = vsel %vm26, %v22, 0
  %v49 = vsel %vm26, %v23, 0
  %51 = vmatprep.subr.mxu0 0.0
  %52 = vmatpush1.msra.mxu0 %v24
  %53 = vmatprep.subr.mxu0 0.0
  %54 = vmatpush1.msra.mxu0 %v25
  %55 = vmatprep.subr.mxu0 0.0
  %56 = vmatpush1.msra.mxu0 0.0
  %57 = vmatprep.subr.mxu0 0.0
  %58 = vmatpush1.msra.mxu0 0.0
  %59 = vmatprep.subr.mxu0 0.0
  %60 = vmatpush1.msra.mxu0 0.0
  %61 = vmatprep.subr.mxu0 0.0
  %62 = vmatpush1.msra.mxu0 0.0
  %63 = vmatprep.subr.mxu0 0.0
  %64 = vmatpush1.msra.mxu0 0.0
  %65 = vmatprep.subr.mxu0 0.0
  %66 = vmatpush1.msra.mxu0 0.0
  %67 = vmatprep.subr.mxu0 0.0
  %68 = vmatpush1.msra.mxu0 0.0
  %69 = vmatprep.subr.mxu0 0.0
  %70 = vmatpush1.msra.mxu0 0.0
  %71 = vmatprep.subr.mxu0 0.0
  %72 = vmatpush1.msra.mxu0 0.0
  %73 = vmatprep.subr.mxu0 0.0
  %74 = vmatpush1.msra.mxu0 0.0
  %75 = vmatprep.subr.mxu0 0.0
  %76 = vmatpush1.msra.mxu0 0.0
  %77 = vmatprep.subr.mxu0 0.0
  %78 = vmatpush1.msra.mxu0 0.0
  %79 = vmatprep.subr.mxu0 0.0
  %80 = vmatpush1.msra.mxu0 0.0
  %81 = vmatprep.subr.mxu0 0.0
  %82 = vmatpush1.msra.mxu0 0.0
  %83 = vmatprep.subr.mxu0 0.0
  %84 = vmatpush1.msra.mxu0 0.0
  %85 = vmatprep.subr.mxu0 0.0
  %86 = vmatpush1.msra.mxu0 0.0
  %87 = vmatprep.subr.mxu0 0.0
  %88 = vmatpush1.msra.mxu0 0.0
  %89 = vmatprep.subr.mxu0 0.0
  %90 = vmatpush1.msra.mxu0 0.0
  %91 = vmatprep.subr.mxu0 0.0
  %92 = vmatpush1.msra.mxu0 0.0
  %93 = vmatprep.subr.mxu0 0.0
  %94 = vmatpush1.msra.mxu0 0.0
  %95 = vmatprep.subr.mxu0 0.0
  %96 = vmatpush1.msra.mxu0 0.0
  %97 = vmatprep.subr.mxu0 0.0
  %98 = vmatpush1.msra.mxu0 0.0
  %99 = vmatprep.subr.mxu0 0.0
  %100 = vmatpush1.msra.mxu0 0.0
  %101 = vmatprep.subr.mxu0 0.0
  %102 = vmatpush1.msra.mxu0 0.0
  %103 = vmatprep.subr.mxu0 0.0
  %104 = vmatpush1.msra.mxu0 0.0
  %105 = vmatprep.subr.mxu0 0.0
  %106 = vmatpush1.msra.mxu0 0.0
  %107 = vmatprep.subr.mxu0 0.0
  %108 = vmatpush1.msra.mxu0 0.0
  %109 = vmatprep.subr.mxu0 0.0
  %110 = vmatpush1.msra.mxu0 0.0
  %111 = vmatprep.subr.mxu0 0.0
  %112 = vmatpush1.msra.mxu0 0.0
  %113 = vmatprep.subr.mxu0 0.0
  %114 = vmatpush1.msra.mxu0 0.0
  %115 = vmatprep.mubr.f32.mxu0 0.0
  %116 = vmatmul.mubr.f32.gmra.mrb[0].mxu0 %v28
  %v117 = vpop.f32.mrb[0].mxu0
  %v118 = vadd.f32 0.0, %v117
  %v119 = vpop.f32.mrb[0].mxu0
  %120 = vmatprep.mubr.f32.mxu0 0.0
  %121 = vmatmul.mubr.f32.gmra.mrb[0].mxu0 %v31
  %v122 = vpop.f32.mrb[0].mxu0
  %v123 = vadd.f32 0.0, %v122
  %v124 = vpop.f32.mrb[0].mxu0
  %125 = vmatprep.mubr.f32.mxu0 0.0
  %126 = vmatmul.mubr.f32.gmra.mrb[0].mxu0 %v34
  %v127 = vpop.f32.mrb[0].mxu0
  %v128 = vadd.f32 0.0, %v127
  %v129 = vpop.f32.mrb[0].mxu0
  %130 = vmatprep.mubr.f32.mxu0 0.0
  %131 = vmatmul.mubr.f32.gmra.mrb[0].mxu0 %v37
  %v132 = vpop.f32.mrb[0].mxu0
  %v133 = vadd.f32 0.0, %v132
  %v134 = vpop.f32.mrb[0].mxu0
  %135 = vmatprep.mubr.f32.mxu0 0.0
  %136 = vmatmul.mubr.f32.gmra.mrb[0].mxu0 %v40
  %v137 = vpop.f32.mrb[0].mxu0
  %v138 = vadd.f32 0.0, %v137
  %v139 = vpop.f32.mrb[0].mxu0
  %140 = vmatprep.mubr.f32.mxu0 0.0
  %141 = vmatmul.mubr.f32.gmra.mrb[0].mxu0 %v43
  %v142 = vpop.f32.mrb[0].mxu0
  %v143 = vadd.f32 0.0, %v142
  %v144 = vpop.f32.mrb[0].mxu0
  %145 = vmatprep.mubr.f32.mxu0 0.0
  %146 = vmatmul.mubr.f32.gmra.mrb[0].mxu0 %v46
  %v147 = vpop.f32.mrb[0].mxu0
  %v148 = vadd.f32 0.0, %v147
  %v149 = vpop.f32.mrb[0].mxu0
  %150 = vmatprep.mubr.f32.mxu0 0.0
  %151 = vmatmul.mubr.f32.gmra.mrb[0].mxu0 %v49
  %v152 = vpop.f32.mrb[0].mxu0
  %v153 = vadd.f32 0.0, %v152
  %v154 = vpop.f32.mrb[0].mxu0
  %155 = vdwg.mxu0
  %v156 = vld [vmem:[%s2] sm:$0xff]
  %v157 = vld [vmem:[%s2 + $0x8] sm:$0xff]
  %v158 = vld [vmem:[%s2 + $0x10] sm:$0xff]
  %v159 = vld [vmem:[%s2 + $0x18] sm:$0xff]
  %vm160 = vcmask 261120
  %v162 = vsel %vm160, %v118, 0
  %v165 = vsel %vm160, %v123, 0
  %v168 = vsel %vm160, %v128, 0
  %v171 = vsel %vm160, %v133, 0
  %v174 = vsel %vm160, %v138, 0
  %v177 = vsel %vm160, %v143, 0
  %v180 = vsel %vm160, %v148, 0
  %v183 = vsel %vm160, %v153, 0
  %185 = vmatprep.subr.mxu0 0.0
  %186 = vmatpush1.msra.mxu0 %v156
  %187 = vmatprep.subr.mxu0 0.0
  %188 = vmatpush1.msra.mxu0 %v157
  %189 = vmatprep.subr.mxu0 0.0
  %190 = vmatpush1.msra.mxu0 %v158
  %191 = vmatprep.subr.mxu0 0.0
  %192 = vmatpush1.msra.mxu0 %v159
  %193 = vmatprep.subr.mxu0 0.0
  %194 = vmatpush1.msra.mxu0 0.0
  %195 = vmatprep.subr.mxu0 0.0
  %196 = vmatpush1.msra.mxu0 0.0
  %197 = vmatprep.subr.mxu0 0.0
  %198 = vmatpush1.msra.mxu0 0.0
  %199 = vmatprep.subr.mxu0 0.0
  %200 = vmatpush1.msra.mxu0 0.0
  %201 = vmatprep.subr.mxu0 0.0
  %202 = vmatpush1.msra.mxu0 0.0
  %203 = vmatprep.subr.mxu0 0.0
  %204 = vmatpush1.msra.mxu0 0.0
  %205 = vmatprep.subr.mxu0 0.0
  %206 = vmatpush1.msra.mxu0 0.0
  %207 = vmatprep.subr.mxu0 0.0
  %208 = vmatpush1.msra.mxu0 0.0
  %209 = vmatprep.subr.mxu0 0.0
  %210 = vmatpush1.msra.mxu0 0.0
  %211 = vmatprep.subr.mxu0 0.0
  %212 = vmatpush1.msra.mxu0 0.0
  %213 = vmatprep.subr.mxu0 0.0
  %214 = vmatpush1.msra.mxu0 0.0
  %215 = vmatprep.subr.mxu0 0.0
  %216 = vmatpush1.msra.mxu0 0.0
  %217 = vmatprep.subr.mxu0 0.0
  %218 = vmatpush1.msra.mxu0 0.0
  %219 = vmatprep.subr.mxu0 0.0
  %220 = vmatpush1.msra.mxu0 0.0
  %221 = vmatprep.subr.mxu0 0.0
  %222 = vmatpush1.msra.mxu0 0.0
  %223 = vmatprep.subr.mxu0 0.0
  %224 = vmatpush1.msra.mxu0 0.0
  %225 = vmatprep.subr.mxu0 0.0
  %226 = vmatpush1.msra.mxu0 0.0
  %227 = vmatprep.subr.mxu0 0.0
  %228 = vmatpush1.msra.mxu0 0.0
  %229 = vmatprep.subr.mxu0 0.0
  %230 = vmatpush1.msra.mxu0 0.0
  %231 = vmatprep.subr.mxu0 0.0
  %232 = vmatpush1.msra.mxu0 0.0
  %233 = vmatprep.subr.mxu0 0.0
  %234 = vmatpush1.msra.mxu0 0.0
  %235 = vmatprep.subr.mxu0 0.0
  %236 = vmatpush1.msra.mxu0 0.0
  %237 = vmatprep.subr.mxu0 0.0
  %238 = vmatpush1.msra.mxu0 0.0
  %239 = vmatprep.subr.mxu0 0.0
  %240 = vmatpush1.msra.mxu0 0.0
  %241 = vmatprep.subr.mxu0 0.0
  %242 = vmatpush1.msra.mxu0 0.0
  %243 = vmatprep.subr.mxu0 0.0
  %244 = vmatpush1.msra.mxu0 0.0
  %245 = vmatprep.subr.mxu0 0.0
  %246 = vmatpush1.msra.mxu0 0.0
  %247 = vmatprep.subr.mxu0 0.0
  %248 = vmatpush1.msra.mxu0 0.0
  %249 = vmatprep.mubr.f32.mxu0 0.0
  %250 = vmatmul.mubr.f32.gmra.mrb[0].mxu0 %v162
  %v251 = vpop.f32.mrb[0].mxu0
  %v252 = vadd.f32 0.0, %v251
  %v253 = vpop.f32.mrb[0].mxu0
  %254 = vmatprep.mubr.f32.mxu0 0.0
  %255 = vmatmul.mubr.f32.gmra.mrb[0].mxu0 %v165
  %v256 = vpop.f32.mrb[0].mxu0
  %v257 = vadd.f32 0.0, %v256
  %v258 = vpop.f32.mrb[0].mxu0
  %259 = vmatprep.mubr.f32.mxu0 0.0
  %260 = vmatmul.mubr.f32.gmra.mrb[0].mxu0 %v168
  %v261 = vpop.f32.mrb[0].mxu0
  %v262 = vadd.f32 0.0, %v261
  %v263 = vpop.f32.mrb[0].mxu0
  %264 = vmatprep.mubr.f32.mxu0 0.0
  %265 = vmatmul.mubr.f32.gmra.mrb[0].mxu0 %v171
  %v266 = vpop.f32.mrb[0].mxu0
  %v267 = vadd.f32 0.0, %v266
  %v268 = vpop.f32.mrb[0].mxu0
  %269 = vmatprep.mubr.f32.mxu0 0.0
  %270 = vmatmul.mubr.f32.gmra.mrb[0].mxu0 %v174
  %v271 = vpop.f32.mrb[0].mxu0
  %v272 = vadd.f32 0.0, %v271
  %v273 = vpop.f32.mrb[0].mxu0
  %274 = vmatprep.mubr.f32.mxu0 0.0
  %275 = vmatmul.mubr.f32.gmra.mrb[0].mxu0 %v177
  %v276 = vpop.f32.mrb[0].mxu0
  %v277 = vadd.f32 0.0, %v276
  %v278 = vpop.f32.mrb[0].mxu0
  %279 = vmatprep.mubr.f32.mxu0 0.0
  %280 = vmatmul.mubr.f32.gmra.mrb[0].mxu0 %v180
  %v281 = vpop.f32.mrb[0].mxu0
  %v282 = vadd.f32 0.0, %v281
  %v283 = vpop.f32.mrb[0].mxu0
  %284 = vmatprep.mubr.f32.mxu0 0.0
  %285 = vmatmul.mubr.f32.gmra.mrb[0].mxu0 %v183
  %v286 = vpop.f32.mrb[0].mxu0
  %v287 = vadd.f32 0.0, %v286
  %v288 = vpop.f32.mrb[0].mxu0
  %289 = vdwg.mxu0
  %vm290 = vcmask 15360
  %291 = vst.msk [vmem:[%s4] sm:$0xff] %vm290, %v252
  %292 = vst.msk [vmem:[%s4 + $0x8] sm:$0xff] %vm290, %v257
  %293 = vst.msk [vmem:[%s4 + $0x10] sm:$0xff] %vm290, %v262
  %294 = vst.msk [vmem:[%s4 + $0x18] sm:$0xff] %vm290, %v267
  %295 = vst.msk [vmem:[%s4 + $0x20] sm:$0xff] %vm290, %v272
  %296 = vst.msk [vmem:[%s4 + $0x28] sm:$0xff] %vm290, %v277
  %297 = vst.msk [vmem:[%s4 + $0x30] sm:$0xff] %vm290, %v282
  %298 = vst.msk [vmem:[%s4 + $0x38] sm:$0xff] %vm290, %v287
  %v299 = vpack.c.bf16 %v123, %v118
  %v300 = vpack.c.bf16 %v133, %v128
  %v301 = vpack.c.bf16 %v143, %v138
  %v302 = vpack.c.bf16 %v153, %v148
  %v307 = vunpack.c.l.b16 %v299
  %v308 = vunpack.c.h.b16 %v299
  %v309 = vunpack.c.l.b16 %v300
  %v310 = vunpack.c.h.b16 %v300
  %v311 = vunpack.c.l.b16 %v301
  %v312 = vunpack.c.h.b16 %v301
  %v313 = vunpack.c.l.b16 %v302
  %v314 = vunpack.c.h.b16 %v302
  %v315 = vpack.c.b16 %v307, %v307
  %v316 = vpack.c.b16 %v308, %v308
  %v317 = vpack.c.b16 %v309, %v309
  %v318 = vpack.c.b16 %v310, %v310
  %v319 = vpack.c.b16 %v311, %v311
  %v320 = vpack.c.b16 %v312, %v312
  %v321 = vpack.c.b16 %v313, %v313
  %v322 = vpack.c.b16 %v314, %v314
  %vm331 = vcmask 257024
  %332 = vst.msk [vmem:[%s3] sm:$0xf] %vm331, %v315
  %333 = vst.msk [vmem:[%s3 + $0x4] sm:$0xf] %vm331, %v316
  %334 = vst.msk [vmem:[%s3 + $0x8] sm:$0xf] %vm331, %v317
  %335 = vst.msk [vmem:[%s3 + $0xc] sm:$0xf] %vm331, %v318
  %336 = vst.msk [vmem:[%s3 + $0x10] sm:$0xf] %vm331, %v319
  %337 = vst.msk [vmem:[%s3 + $0x14] sm:$0xf] %vm331, %v320
  %338 = vst.msk [vmem:[%s3 + $0x18] sm:$0xf] %vm331, %v321
  %339 = vst.msk [vmem:[%s3 + $0x1c] sm:$0xf] %vm331, %v322
  // Predicated region
  $region14: #{tpu_custom_call.1} parent=0 // pred_check
    _
  $region15: #{tpu_custom_call.1} parent=0 // pred_check_branch
    %341 = sbr.rel (0) target = $region17
  $region16: #{tpu_custom_call.1} parent=0 // pred_region
    _
  $region17: #{tpu_custom_call.1} parent=0 // pred_fallthru
    _
  // Predicated region
  $region18: #{tpu_custom_call.1} parent=0 // pred_check
    _
  $region19: #{tpu_custom_call.1} parent=0 // pred_check_branch
    %343 = sbr.rel (0) target = $region21
  $region20: #{tpu_custom_call.1} parent=0 // pred_region
    _
  $region21: #{tpu_custom_call.1} parent=0 // pred_fallthru
    _
  // Predicated region
  $region22: #{tpu_custom_call.1} parent=0 // pred_check
    _
  $region23: #{tpu_custom_call.1} parent=0 // pred_check_branch
    %345 = sbr.rel (0) target = $region25
  $region24: #{tpu_custom_call.1} parent=0 // pred_region
    _
  $region25: #{tpu_custom_call.1} parent=0 // pred_fallthru
    _
  // Predicated region
  $region26: #{tpu_custom_call.1} parent=0 // pred_check
    _
  $region27: #{tpu_custom_call.1} parent=0 // pred_check_branch
    %347 = sbr.rel (0) target = $region29
  $region28: #{tpu_custom_call.1} parent=0 // pred_region
    _
  $region29: #{tpu_custom_call.1} parent=0 // pred_fallthru
    _

</llo_original>
